<compile_context>
chip_gen: v5e
topology: v5e:2x2
jax: 0.10.0
libtpu: 0.0.40
codegen_flags: <defaults>
</compile_context>

<pallas_src>
import functools

import jax
import jax.numpy as jnp
import numpy as np
from jax.experimental import pallas as pl
from jax.experimental.pallas import tpu as pltpu


def _round_up(x, m):
    return ((x + m - 1) // m) * m


# ---------------------------------------------------------------------------
# Pallas kernel: one decoder step = embedding gather + nlayers LSTM cells +
# fc head, fully fused, grid-less (single invocation).
# ---------------------------------------------------------------------------
def _decoder_kernel(*refs, nlayers, E, H):
    ids_ref, emb_ref, h0_ref, c0_ref = refs[:4]
    lstm_refs = refs[4:4 + 2 * nlayers]          # (w_fused, bias) per layer
    wfc_ref = refs[4 + 2 * nlayers]
    bfc_ref = refs[5 + 2 * nlayers]
    pred_ref, hN_ref, cN_ref = refs[6 + 2 * nlayers:9 + 2 * nlayers]
    xh_ref = refs[9 + 2 * nlayers]               # [Bp, Kp] f32 staging scratch

    Bp = xh_ref.shape[0]

    # Zero once so zero-padded weight rows never multiply NaN/Inf junk lanes.
    xh_ref[...] = jnp.zeros_like(xh_ref)

    # In-kernel embedding gather: token ids in SMEM, table rows in VMEM.
    for b in range(Bp):                          # static unroll, Bp tiny
        tok = ids_ref[b]
        xh_ref[pl.ds(b, 1), pl.ds(0, E)] = emb_ref[pl.ds(tok, 1), :]

    h_top = None
    for l in range(nlayers):                     # static unroll over layers
        w_ref, b_ref = lstm_refs[2 * l], lstm_refs[2 * l + 1]
        in_dim = E if l == 0 else H
        h_prev = h0_ref[l]                       # [Bp, H] f32
        c_prev = c0_ref[l]                       # [Bp, H] f32

        # Stage [x | h_prev] contiguously -> one fused bf16 matmul per layer.
        xh_ref[:, pl.ds(in_dim, H)] = h_prev
        gates = (jnp.dot(xh_ref[...].astype(jnp.bfloat16), w_ref[...],
                         preferred_element_type=jnp.float32)
                 + b_ref[...])                   # [Bp, Gp] f32, order i|f|g|o

        i_g = jax.nn.sigmoid(gates[:, 0 * H:1 * H])
        f_g = jax.nn.sigmoid(gates[:, 1 * H:2 * H])
        g_g = jnp.tanh(gates[:, 2 * H:3 * H])
        o_g = jax.nn.sigmoid(gates[:, 3 * H:4 * H])

        c_new = f_g * c_prev + i_g * g_g
        h_new = o_g * jnp.tanh(c_new)

        hN_ref[l] = h_new
        cN_ref[l] = c_new

        if l + 1 < nlayers:
            xh_ref[:, pl.ds(0, H)] = h_new       # next layer's x slot
        h_top = h_new

    # fc head: lane-dense [Bp, Vp] f32 store.
    pred_ref[...] = (jnp.dot(h_top.astype(jnp.bfloat16), wfc_ref[...],
                             preferred_element_type=jnp.float32)
                     + bfc_ref[...])


# ---------------------------------------------------------------------------
# One-time parameter packing: fuse w_ih/w_hh, fold biases, pad only the total
# gate width (Gp) and vocab width (Vp), cast matmul weights to bf16.
# ---------------------------------------------------------------------------
def pack_params(params, *, nlayers, embed_dim, hidden_dim, output_dim):
    E, H, V = embed_dim, hidden_dim, output_dim
    Gp = _round_up(4 * H, 128)                   # total gate width (lane-dense)
    Kp = _round_up(max(E + H, 2 * H), 8)         # fused contraction dim
    Vp = _round_up(V, 128)                       # lane-dense vocab dim

    lstm_packed = []
    for l in range(nlayers):
        w_ih, w_hh, b_ih, b_hh = params["lstm"][l]
        in_dim = w_ih.shape[1]
        # fused [in_dim + H, 4H] = [w_ih^T ; w_hh^T], zero-padded to [Kp, Gp]
        w = jnp.concatenate([jnp.transpose(w_ih), jnp.transpose(w_hh)], axis=0)
        w = jnp.pad(w, ((0, Kp - (in_dim + H)), (0, Gp - 4 * H)))
        b = jnp.pad(b_ih + b_hh, (0, Gp - 4 * H)).reshape(1, Gp)
        lstm_packed.append((w.astype(jnp.bfloat16), b.astype(jnp.float32)))

    wfc = jnp.pad(jnp.transpose(params["fc_w"]), ((0, 0), (0, Vp - V)))
    bfc = jnp.pad(params["fc_b"], (0, Vp - V)).reshape(1, Vp)
    fc_packed = (wfc.astype(jnp.bfloat16), bfc.astype(jnp.float32))
    return lstm_packed, fc_packed, dict(E=E, H=H, V=V, Gp=Gp, Kp=Kp, Vp=Vp)


# ---------------------------------------------------------------------------
# One decoder step. State stays in the padded [nlayers, Bp, H] layout across
# steps and is aliased in place (h_p -> hN, c_p -> cN).
#   x_ids_p : [Bp] int32 token ids (batch-padded with any valid id)
#   h_p,c_p : [nlayers, Bp, H] f32
# Returns (pred_p [Bp, Vp], hN_p, cN_p) -- padded; slice outside if needed.
# ---------------------------------------------------------------------------
def decoder_step(x_ids_p, h_p, c_p, embedding, lstm_packed, fc_packed,
                 *, nlayers, E, H, Kp, Vp, Bp):
    flat = []
    for (w, b) in lstm_packed:
        flat.extend([w, b])
    wfc, bfc = fc_packed

    n_inputs = 4 + len(flat) + 2
    in_specs = (
        [pl.BlockSpec(memory_space=pltpu.MemorySpace.SMEM),    # token ids
         pl.BlockSpec(memory_space=pltpu.MemorySpace.VMEM)]    # embedding table
        + [pl.BlockSpec(memory_space=pltpu.MemorySpace.VMEM)] * (n_inputs - 2))

    kernel = functools.partial(_decoder_kernel, nlayers=nlayers, E=E, H=H)
    pred_p, hN_p, cN_p = pl.pallas_call(
        kernel,
        out_shape=(
            jax.ShapeDtypeStruct((Bp, Vp), jnp.float32),
            jax.ShapeDtypeStruct((nlayers, Bp, H), jnp.float32),
            jax.ShapeDtypeStruct((nlayers, Bp, H), jnp.float32),
        ),
        in_specs=in_specs,
        scratch_shapes=[pltpu.VMEM((Bp, Kp), jnp.float32)],
        input_output_aliases={2: 1, 3: 2},       # h_p -> hN, c_p -> cN
    )(x_ids_p, embedding, h_p, c_p, *flat, wfc, bfc)
    # NOTE: padded batch rows of hN/cN carry bias-driven junk; rows are
    # independent so this never leaks into real rows. Slice [:, :B] to read.
    return pred_p, hN_p, cN_p


# ---------------------------------------------------------------------------
# Deterministic PyTorch-style parameter init.
# ---------------------------------------------------------------------------
def init_params(key, *, output_dim, hidden_dim, embed_dim, nlayers):
    k_emb, k_lstm, k_fc = jax.random.split(key, 3)
    params = {
        "embedding": jax.random.normal(k_emb, (output_dim, embed_dim),
                                       jnp.float32),
    }
    bound = 1.0 / np.sqrt(hidden_dim)
    keys = jax.random.split(k_lstm, 4 * nlayers)
    lstm = []
    for l in range(nlayers):
        in_dim = embed_dim if l == 0 else hidden_dim
        kk = keys[4 * l: 4 * l + 4]
        w_ih = jax.random.uniform(kk[0], (4 * hidden_dim, in_dim),
                                  jnp.float32, -bound, bound)
        w_hh = jax.random.uniform(kk[1], (4 * hidden_dim, hidden_dim),
                                  jnp.float32, -bound, bound)
        b_ih = jax.random.uniform(kk[2], (4 * hidden_dim,),
                                  jnp.float32, -bound, bound)
        b_hh = jax.random.uniform(kk[3], (4 * hidden_dim,),
                                  jnp.float32, -bound, bound)
        lstm.append((w_ih, w_hh, b_ih, b_hh))
    params["lstm"] = lstm

    kw, kb = jax.random.split(k_fc)
    fc_bound = 1.0 / np.sqrt(hidden_dim)
    params["fc_w"] = jax.random.uniform(kw, (output_dim, hidden_dim),
                                        jnp.float32, -fc_bound, fc_bound)
    params["fc_b"] = jax.random.uniform(kb, (output_dim,),
                                        jnp.float32, -fc_bound, fc_bound)
    return params


# ---------------------------------------------------------------------------
# Pure-JAX f32 reference for correctness checking.
# ---------------------------------------------------------------------------
def decoder_forward_ref(x_ids, h, c, params, *, nlayers):
    H = h.shape[-1]
    x = jnp.take(params["embedding"], x_ids, axis=0)    # dropout = identity
    h_out, c_out = [], []
    for l in range(nlayers):
        w_ih, w_hh, b_ih, b_hh = params["lstm"][l]
        gates = x @ w_ih.T + h[l] @ w_hh.T + b_ih + b_hh
        i_g = jax.nn.sigmoid(gates[:, 0:H])
        f_g = jax.nn.sigmoid(gates[:, H:2 * H])
        g_g = jnp.tanh(gates[:, 2 * H:3 * H])
        o_g = jax.nn.sigmoid(gates[:, 3 * H:4 * H])
        c_new = f_g * c[l] + i_g * g_g
        h_new = o_g * jnp.tanh(c_new)
        h_out.append(h_new)
        c_out.append(c_new)
        x = h_new
    pred = x @ params["fc_w"].T + params["fc_b"]
    return pred, jnp.stack(h_out, 0), jnp.stack(c_out, 0)


# ---------------------------------------------------------------------------
if __name__ == "__main__":
    OUTPUT_DIM = 50      # vocab size
    EMBED_DIM = 16
    HIDDEN_DIM = 32
    NLAYERS = 2
    BIDIRECT = False     # decoder always uses 1 direction (see module docstring)
    BATCH = 2

    bi_dim = 2 if BIDIRECT else 1
    assert bi_dim == 1   # TODO(synk): bidirect=True decoder path not implemented

    key = jax.random.PRNGKey(0)
    kp, kx, kh, kc = jax.random.split(key, 4)

    params = init_params(kp, output_dim=OUTPUT_DIM, hidden_dim=HIDDEN_DIM,
                         embed_dim=EMBED_DIM, nlayers=NLAYERS)
    lstm_packed, fc_packed, dims = pack_params(
        params, nlayers=NLAYERS, embed_dim=EMBED_DIM,
        hidden_dim=HIDDEN_DIM, output_dim=OUTPUT_DIM)

    B = BATCH
    H = HIDDEN_DIM
    Bp = _round_up(max(B, 8), 8)

    # Inputs matching Decoder.forward: x [batch], h/c [nlayers, batch, hidden].
    x_ids = jax.random.randint(kx, (B,), 0, OUTPUT_DIM, dtype=jnp.int32)
    h0 = jax.random.normal(kh, (NLAYERS, B, H), jnp.float32)
    c0 = jax.random.normal(kc, (NLAYERS, B, H), jnp.float32)

    # Pad ONCE; decode-loop state stays in padded layout across steps.
    ids_p = jnp.pad(x_ids, (0, Bp - B))
    h_p = jnp.pad(h0, ((0, 0), (0, Bp - B), (0, 0)))
    c_p = jnp.pad(c0, ((0, 0), (0, Bp - B), (0, 0)))

    step = jax.jit(
        functools.partial(decoder_step, nlayers=NLAYERS, E=dims["E"], H=H,
                          Kp=dims["Kp"], Vp=dims["Vp"], Bp=Bp),
        donate_argnums=(1, 2))    # recurrent state updated in place

    pred_p, hN_p, cN_p = step(ids_p, h_p, c_p, params["embedding"],
                              lstm_packed, fc_packed)
    pred_p, hN_p, cN_p = jax.block_until_ready((pred_p, hN_p, cN_p))

    pred = pred_p[:B, :OUTPUT_DIM]
    hN = hN_p[:, :B, :]
    cN = cN_p[:, :B, :]

    assert pred.shape == (B, OUTPUT_DIM)
    assert hN.shape == (NLAYERS, B, H)
    assert cN.shape == (NLAYERS, B, H)

    # Correctness check against the pure-JAX f32 reference (bf16 matmul
    # operands -> slightly relaxed tolerance).
    pred_r, h_r, c_r = decoder_forward_ref(x_ids, h0, c0, params,
                                           nlayers=NLAYERS)
    np.testing.assert_allclose(np.asarray(pred), np.asarray(pred_r),
                               rtol=2e-2, atol=2e-2)
    np.testing.assert_allclose(np.asarray(hN), np.asarray(h_r),
                               rtol=2e-2, atol=2e-2)
    np.testing.assert_allclose(np.asarray(cN), np.asarray(c_r),
                               rtol=2e-2, atol=2e-2)

    print("KERNEL_OK")
</pallas_src>

<mosaic_0001>
module attributes {stable_mosaic.version = 11 : i64} {
  func.func @_decoder_kernel(%arg0: memref<8xi32, #tpu.memory_space<smem>>, %arg1: memref<50x16xf32, #tpu.memory_space<vmem>>, %arg2: memref<2x8x32xf32, #tpu.memory_space<vmem>>, %arg3: memref<2x8x32xf32, #tpu.memory_space<vmem>>, %arg4: memref<64x128xbf16, #tpu.memory_space<vmem>>, %arg5: memref<1x128xf32, #tpu.memory_space<vmem>>, %arg6: memref<64x128xbf16, #tpu.memory_space<vmem>>, %arg7: memref<1x128xf32, #tpu.memory_space<vmem>>, %arg8: memref<32x128xbf16, #tpu.memory_space<vmem>>, %arg9: memref<1x128xf32, #tpu.memory_space<vmem>>, %arg10: memref<8x128xf32, #tpu.memory_space<vmem>>, %arg11: memref<2x8x32xf32, #tpu.memory_space<vmem>>, %arg12: memref<2x8x32xf32, #tpu.memory_space<vmem>>, %arg13: memref<8x64xf32, #tpu.memory_space<vmem>>) attributes {dimension_semantics = [], scalar_prefetch = 0 : i64, scratch_operands = 1 : i64, tpu.core_type = #tpu.core_type<tc>} {
    %cst = arith.constant 0.000000e+00 : f32
    %0 = vector.broadcast %cst : f32 to vector<8x64xf32>
    %c0 = arith.constant 0 : index
    %c0_0 = arith.constant 0 : index
    %1 = vector.load %arg13[%c0, %c0_0] : memref<8x64xf32, #tpu.memory_space<vmem>>, vector<8x64xf32>
    tpu.vector_store %arg13[%c0, %c0_0], %0 {strides = array<i32>} : memref<8x64xf32, #tpu.memory_space<vmem>>, vector<8x64xf32>,
    %c0_1 = arith.constant 0 : index
    %2 = memref.load %arg0[%c0_1] : memref<8xi32, #tpu.memory_space<smem>>
    %3 = arith.index_cast %2 : i32 to index
    %c0_2 = arith.constant 0 : index
    %4 = vector.load %arg1[%3, %c0_2] : memref<50x16xf32, #tpu.memory_space<vmem>>, vector<1x16xf32>
    %c0_3 = arith.constant 0 : index
    %c0_4 = arith.constant 0 : index
    %5 = vector.load %arg13[%c0_3, %c0_4] : memref<8x64xf32, #tpu.memory_space<vmem>>, vector<1x16xf32>
    tpu.vector_store %arg13[%c0_3, %c0_4], %4 {strides = array<i32>} : memref<8x64xf32, #tpu.memory_space<vmem>>, vector<1x16xf32>,
    %c1 = arith.constant 1 : index
    %6 = memref.load %arg0[%c1] : memref<8xi32, #tpu.memory_space<smem>>
    %7 = arith.index_cast %6 : i32 to index
    %c0_5 = arith.constant 0 : index
    %8 = vector.load %arg1[%7, %c0_5] : memref<50x16xf32, #tpu.memory_space<vmem>>, vector<1x16xf32>
    %c1_6 = arith.constant 1 : index
    %c0_7 = arith.constant 0 : index
    %9 = vector.load %arg13[%c1_6, %c0_7] : memref<8x64xf32, #tpu.memory_space<vmem>>, vector<1x16xf32>
    tpu.vector_store %arg13[%c1_6, %c0_7], %8 {strides = array<i32>} : memref<8x64xf32, #tpu.memory_space<vmem>>, vector<1x16xf32>,
    %c2 = arith.constant 2 : index
    %10 = memref.load %arg0[%c2] : memref<8xi32, #tpu.memory_space<smem>>
    %11 = arith.index_cast %10 : i32 to index
    %c0_8 = arith.constant 0 : index
    %12 = vector.load %arg1[%11, %c0_8] : memref<50x16xf32, #tpu.memory_space<vmem>>, vector<1x16xf32>
    %c2_9 = arith.constant 2 : index
    %c0_10 = arith.constant 0 : index
    %13 = vector.load %arg13[%c2_9, %c0_10] : memref<8x64xf32, #tpu.memory_space<vmem>>, vector<1x16xf32>
    tpu.vector_store %arg13[%c2_9, %c0_10], %12 {strides = array<i32>} : memref<8x64xf32, #tpu.memory_space<vmem>>, vector<1x16xf32>,
    %c3 = arith.constant 3 : index
    %14 = memref.load %arg0[%c3] : memref<8xi32, #tpu.memory_space<smem>>
    %15 = arith.index_cast %14 : i32 to index
    %c0_11 = arith.constant 0 : index
    %16 = vector.load %arg1[%15, %c0_11] : memref<50x16xf32, #tpu.memory_space<vmem>>, vector<1x16xf32>
    %c3_12 = arith.constant 3 : index
    %c0_13 = arith.constant 0 : index
    %17 = vector.load %arg13[%c3_12, %c0_13] : memref<8x64xf32, #tpu.memory_space<vmem>>, vector<1x16xf32>
    tpu.vector_store %arg13[%c3_12, %c0_13], %16 {strides = array<i32>} : memref<8x64xf32, #tpu.memory_space<vmem>>, vector<1x16xf32>,
    %c4 = arith.constant 4 : index
    %18 = memref.load %arg0[%c4] : memref<8xi32, #tpu.memory_space<smem>>
    %19 = arith.index_cast %18 : i32 to index
    %c0_14 = arith.constant 0 : index
    %20 = vector.load %arg1[%19, %c0_14] : memref<50x16xf32, #tpu.memory_space<vmem>>, vector<1x16xf32>
    %c4_15 = arith.constant 4 : index
    %c0_16 = arith.constant 0 : index
    %21 = vector.load %arg13[%c4_15, %c0_16] : memref<8x64xf32, #tpu.memory_space<vmem>>, vector<1x16xf32>
    tpu.vector_store %arg13[%c4_15, %c0_16], %20 {strides = array<i32>} : memref<8x64xf32, #tpu.memory_space<vmem>>, vector<1x16xf32>,
    %c5 = arith.constant 5 : index
    %22 = memref.load %arg0[%c5] : memref<8xi32, #tpu.memory_space<smem>>
    %23 = arith.index_cast %22 : i32 to index
    %c0_17 = arith.constant 0 : index
    %24 = vector.load %arg1[%23, %c0_17] : memref<50x16xf32, #tpu.memory_space<vmem>>, vector<1x16xf32>
    %c5_18 = arith.constant 5 : index
    %c0_19 = arith.constant 0 : index
    %25 = vector.load %arg13[%c5_18, %c0_19] : memref<8x64xf32, #tpu.memory_space<vmem>>, vector<1x16xf32>
    tpu.vector_store %arg13[%c5_18, %c0_19], %24 {strides = array<i32>} : memref<8x64xf32, #tpu.memory_space<vmem>>, vector<1x16xf32>,
    %c6 = arith.constant 6 : index
    %26 = memref.load %arg0[%c6] : memref<8xi32, #tpu.memory_space<smem>>
    %27 = arith.index_cast %26 : i32 to index
    %c0_20 = arith.constant 0 : index
    %28 = vector.load %arg1[%27, %c0_20] : memref<50x16xf32, #tpu.memory_space<vmem>>, vector<1x16xf32>
    %c6_21 = arith.constant 6 : index
    %c0_22 = arith.constant 0 : index
    %29 = vector.load %arg13[%c6_21, %c0_22] : memref<8x64xf32, #tpu.memory_space<vmem>>, vector<1x16xf32>
    tpu.vector_store %arg13[%c6_21, %c0_22], %28 {strides = array<i32>} : memref<8x64xf32, #tpu.memory_space<vmem>>, vector<1x16xf32>,
    %c7 = arith.constant 7 : index
    %30 = memref.load %arg0[%c7] : memref<8xi32, #tpu.memory_space<smem>>
    %31 = arith.index_cast %30 : i32 to index
    %c0_23 = arith.constant 0 : index
    %32 = vector.load %arg1[%31, %c0_23] : memref<50x16xf32, #tpu.memory_space<vmem>>, vector<1x16xf32>
    %c7_24 = arith.constant 7 : index
    %c0_25 = arith.constant 0 : index
    %33 = vector.load %arg13[%c7_24, %c0_25] : memref<8x64xf32, #tpu.memory_space<vmem>>, vector<1x16xf32>
    tpu.vector_store %arg13[%c7_24, %c0_25], %32 {strides = array<i32>} : memref<8x64xf32, #tpu.memory_space<vmem>>, vector<1x16xf32>,
    %c0_26 = arith.constant 0 : index
    %c0_27 = arith.constant 0 : index
    %c0_28 = arith.constant 0 : index
    %34 = vector.load %arg2[%c0_26, %c0_27, %c0_28] : memref<2x8x32xf32, #tpu.memory_space<vmem>>, vector<1x8x32xf32>
    %35 = vector.shape_cast %34 : vector<1x8x32xf32> to vector<8x32xf32>
    %c0_29 = arith.constant 0 : index
    %c0_30 = arith.constant 0 : index
    %c0_31 = arith.constant 0 : index
    %36 = vector.load %arg3[%c0_29, %c0_30, %c0_31] : memref<2x8x32xf32, #tpu.memory_space<vmem>>, vector<1x8x32xf32>
    %37 = vector.shape_cast %36 : vector<1x8x32xf32> to vector<8x32xf32>
    %c0_32 = arith.constant 0 : index
    %c16 = arith.constant 16 : index
    %38 = vector.load %arg13[%c0_32, %c16] : memref<8x64xf32, #tpu.memory_space<vmem>>, vector<8x32xf32>
    tpu.vector_store %arg13[%c0_32, %c16], %35 {strides = array<i32>} : memref<8x64xf32, #tpu.memory_space<vmem>>, vector<8x32xf32>,
    %c0_33 = arith.constant 0 : index
    %c0_34 = arith.constant 0 : index
    %39 = vector.load %arg13[%c0_33, %c0_34] : memref<8x64xf32, #tpu.memory_space<vmem>>, vector<8x64xf32>
    %40 = arith.truncf %39 : vector<8x64xf32> to vector<8x64xbf16>
    %c0_35 = arith.constant 0 : index
    %c0_36 = arith.constant 0 : index
    %41 = vector.load %arg4[%c0_35, %c0_36] : memref<64x128xbf16, #tpu.memory_space<vmem>>, vector<64x128xbf16>
    %cst_37 = arith.constant dense<0.000000e+00> : vector<8x128xf32>
    %42 = tpu.matmul %40, %41, %cst_37 {dimension_numbers = #tpu.dot_dimension_numbers<[1], [0], [0], [1], [0, 0, 1, 1], [], []>} : vector<8x64xbf16>, vector<64x128xbf16>, vector<8x128xf32> -> vector<8x128xf32>
    %c0_38 = arith.constant 0 : index
    %c0_39 = arith.constant 0 : index
    %43 = vector.load %arg5[%c0_38, %c0_39] : memref<1x128xf32, #tpu.memory_space<vmem>>, vector<1x128xf32>
    %44 = vector.broadcast %43 : vector<1x128xf32> to vector<8x128xf32>
    %45 = arith.addf %42, %44 : vector<8x128xf32>
    %46 = vector.extract_strided_slice %45 {offsets = [0, 0], sizes = [8, 32], strides = [1, 1]} : vector<8x128xf32> to vector<8x32xf32>
    %47 = arith.negf %46 : vector<8x32xf32>
    %48 = math.exp %47 : vector<8x32xf32>
    %cst_40 = arith.constant 1.000000e+00 : f32
    %49 = vector.broadcast %cst_40 : f32 to vector<8x32xf32>
    %50 = arith.addf %49, %48 : vector<8x32xf32>
    %51 = arith.divf %49, %50 : vector<8x32xf32>
    %52 = vector.extract_strided_slice %45 {offsets = [0, 32], sizes = [8, 32], strides = [1, 1]} : vector<8x128xf32> to vector<8x32xf32>
    %53 = arith.negf %52 : vector<8x32xf32>
    %54 = math.exp %53 : vector<8x32xf32>
    %cst_41 = arith.constant 1.000000e+00 : f32
    %55 = vector.broadcast %cst_41 : f32 to vector<8x32xf32>
    %56 = arith.addf %55, %54 : vector<8x32xf32>
    %57 = arith.divf %55, %56 : vector<8x32xf32>
    %58 = vector.extract_strided_slice %45 {offsets = [0, 64], sizes = [8, 32], strides = [1, 1]} : vector<8x128xf32> to vector<8x32xf32>
    %59 = math.tanh %58 : vector<8x32xf32>
    %60 = vector.extract_strided_slice %45 {offsets = [0, 96], sizes = [8, 32], strides = [1, 1]} : vector<8x128xf32> to vector<8x32xf32>
    %61 = arith.negf %60 : vector<8x32xf32>
    %62 = math.exp %61 : vector<8x32xf32>
    %cst_42 = arith.constant 1.000000e+00 : f32
    %63 = vector.broadcast %cst_42 : f32 to vector<8x32xf32>
    %64 = arith.addf %63, %62 : vector<8x32xf32>
    %65 = arith.divf %63, %64 : vector<8x32xf32>
    %66 = arith.mulf %57, %37 : vector<8x32xf32>
    %67 = arith.mulf %51, %59 : vector<8x32xf32>
    %68 = arith.addf %66, %67 : vector<8x32xf32>
    %69 = math.tanh %68 : vector<8x32xf32>
    %70 = arith.mulf %65, %69 : vector<8x32xf32>
    %c0_43 = arith.constant 0 : index
    %c0_44 = arith.constant 0 : index
    %c0_45 = arith.constant 0 : index
    %71 = vector.load %arg11[%c0_43, %c0_44, %c0_45] : memref<2x8x32xf32, #tpu.memory_space<vmem>>, vector<1x8x32xf32>
    %72 = vector.shape_cast %71 : vector<1x8x32xf32> to vector<8x32xf32>
    %73 = vector.shape_cast %70 : vector<8x32xf32> to vector<1x8x32xf32>
    tpu.vector_store %arg11[%c0_43, %c0_44, %c0_45], %73 {strides = array<i32>} : memref<2x8x32xf32, #tpu.memory_space<vmem>>, vector<1x8x32xf32>,
    %c0_46 = arith.constant 0 : index
    %c0_47 = arith.constant 0 : index
    %c0_48 = arith.constant 0 : index
    %74 = vector.load %arg12[%c0_46, %c0_47, %c0_48] : memref<2x8x32xf32, #tpu.memory_space<vmem>>, vector<1x8x32xf32>
    %75 = vector.shape_cast %74 : vector<1x8x32xf32> to vector<8x32xf32>
    %76 = vector.shape_cast %68 : vector<8x32xf32> to vector<1x8x32xf32>
    tpu.vector_store %arg12[%c0_46, %c0_47, %c0_48], %76 {strides = array<i32>} : memref<2x8x32xf32, #tpu.memory_space<vmem>>, vector<1x8x32xf32>,
    %c0_49 = arith.constant 0 : index
    %c0_50 = arith.constant 0 : index
    %77 = vector.load %arg13[%c0_49, %c0_50] : memref<8x64xf32, #tpu.memory_space<vmem>>, vector<8x32xf32>
    tpu.vector_store %arg13[%c0_49, %c0_50], %70 {strides = array<i32>} : memref<8x64xf32, #tpu.memory_space<vmem>>, vector<8x32xf32>,
    %c1_51 = arith.constant 1 : index
    %c0_52 = arith.constant 0 : index
    %c0_53 = arith.constant 0 : index
    %78 = vector.load %arg2[%c1_51, %c0_52, %c0_53] : memref<2x8x32xf32, #tpu.memory_space<vmem>>, vector<1x8x32xf32>
    %79 = vector.shape_cast %78 : vector<1x8x32xf32> to vector<8x32xf32>
    %c1_54 = arith.constant 1 : index
    %c0_55 = arith.constant 0 : index
    %c0_56 = arith.constant 0 : index
    %80 = vector.load %arg3[%c1_54, %c0_55, %c0_56] : memref<2x8x32xf32, #tpu.memory_space<vmem>>, vector<1x8x32xf32>
    %81 = vector.shape_cast %80 : vector<1x8x32xf32> to vector<8x32xf32>
    %c0_57 = arith.constant 0 : index
    %c32 = arith.constant 32 : index
    %82 = vector.load %arg13[%c0_57, %c32] : memref<8x64xf32, #tpu.memory_space<vmem>>, vector<8x32xf32>
    tpu.vector_store %arg13[%c0_57, %c32], %79 {strides = array<i32>} : memref<8x64xf32, #tpu.memory_space<vmem>>, vector<8x32xf32>,
    %c0_58 = arith.constant 0 : index
    %c0_59 = arith.constant 0 : index
    %83 = vector.load %arg13[%c0_58, %c0_59] : memref<8x64xf32, #tpu.memory_space<vmem>>, vector<8x64xf32>
    %84 = arith.truncf %83 : vector<8x64xf32> to vector<8x64xbf16>
    %c0_60 = arith.constant 0 : index
    %c0_61 = arith.constant 0 : index
    %85 = vector.load %arg6[%c0_60, %c0_61] : memref<64x128xbf16, #tpu.memory_space<vmem>>, vector<64x128xbf16>
    %cst_62 = arith.constant dense<0.000000e+00> : vector<8x128xf32>
    %86 = tpu.matmul %84, %85, %cst_62 {dimension_numbers = #tpu.dot_dimension_numbers<[1], [0], [0], [1], [0, 0, 1, 1], [], []>} : vector<8x64xbf16>, vector<64x128xbf16>, vector<8x128xf32> -> vector<8x128xf32>
    %c0_63 = arith.constant 0 : index
    %c0_64 = arith.constant 0 : index
    %87 = vector.load %arg7[%c0_63, %c0_64] : memref<1x128xf32, #tpu.memory_space<vmem>>, vector<1x128xf32>
    %88 = vector.broadcast %87 : vector<1x128xf32> to vector<8x128xf32>
    %89 = arith.addf %86, %88 : vector<8x128xf32>
    %90 = vector.extract_strided_slice %89 {offsets = [0, 0], sizes = [8, 32], strides = [1, 1]} : vector<8x128xf32> to vector<8x32xf32>
    %91 = arith.negf %90 : vector<8x32xf32>
    %92 = math.exp %91 : vector<8x32xf32>
    %cst_65 = arith.constant 1.000000e+00 : f32
    %93 = vector.broadcast %cst_65 : f32 to vector<8x32xf32>
    %94 = arith.addf %93, %92 : vector<8x32xf32>
    %95 = arith.divf %93, %94 : vector<8x32xf32>
    %96 = vector.extract_strided_slice %89 {offsets = [0, 32], sizes = [8, 32], strides = [1, 1]} : vector<8x128xf32> to vector<8x32xf32>
    %97 = arith.negf %96 : vector<8x32xf32>
    %98 = math.exp %97 : vector<8x32xf32>
    %cst_66 = arith.constant 1.000000e+00 : f32
    %99 = vector.broadcast %cst_66 : f32 to vector<8x32xf32>
    %100 = arith.addf %99, %98 : vector<8x32xf32>
    %101 = arith.divf %99, %100 : vector<8x32xf32>
    %102 = vector.extract_strided_slice %89 {offsets = [0, 64], sizes = [8, 32], strides = [1, 1]} : vector<8x128xf32> to vector<8x32xf32>
    %103 = math.tanh %102 : vector<8x32xf32>
    %104 = vector.extract_strided_slice %89 {offsets = [0, 96], sizes = [8, 32], strides = [1, 1]} : vector<8x128xf32> to vector<8x32xf32>
    %105 = arith.negf %104 : vector<8x32xf32>
    %106 = math.exp %105 : vector<8x32xf32>
    %cst_67 = arith.constant 1.000000e+00 : f32
    %107 = vector.broadcast %cst_67 : f32 to vector<8x32xf32>
    %108 = arith.addf %107, %106 : vector<8x32xf32>
    %109 = arith.divf %107, %108 : vector<8x32xf32>
    %110 = arith.mulf %101, %81 : vector<8x32xf32>
    %111 = arith.mulf %95, %103 : vector<8x32xf32>
    %112 = arith.addf %110, %111 : vector<8x32xf32>
    %113 = math.tanh %112 : vector<8x32xf32>
    %114 = arith.mulf %109, %113 : vector<8x32xf32>
    %c1_68 = arith.constant 1 : index
    %c0_69 = arith.constant 0 : index
    %c0_70 = arith.constant 0 : index
    %115 = vector.load %arg11[%c1_68, %c0_69, %c0_70] : memref<2x8x32xf32, #tpu.memory_space<vmem>>, vector<1x8x32xf32>
    %116 = vector.shape_cast %115 : vector<1x8x32xf32> to vector<8x32xf32>
    %117 = vector.shape_cast %114 : vector<8x32xf32> to vector<1x8x32xf32>
    tpu.vector_store %arg11[%c1_68, %c0_69, %c0_70], %117 {strides = array<i32>} : memref<2x8x32xf32, #tpu.memory_space<vmem>>, vector<1x8x32xf32>,
    %c1_71 = arith.constant 1 : index
    %c0_72 = arith.constant 0 : index
    %c0_73 = arith.constant 0 : index
    %118 = vector.load %arg12[%c1_71, %c0_72, %c0_73] : memref<2x8x32xf32, #tpu.memory_space<vmem>>, vector<1x8x32xf32>
    %119 = vector.shape_cast %118 : vector<1x8x32xf32> to vector<8x32xf32>
    %120 = vector.shape_cast %112 : vector<8x32xf32> to vector<1x8x32xf32>
    tpu.vector_store %arg12[%c1_71, %c0_72, %c0_73], %120 {strides = array<i32>} : memref<2x8x32xf32, #tpu.memory_space<vmem>>, vector<1x8x32xf32>,
    %121 = arith.truncf %114 : vector<8x32xf32> to vector<8x32xbf16>
    %c0_74 = arith.constant 0 : index
    %c0_75 = arith.constant 0 : index
    %122 = vector.load %arg8[%c0_74, %c0_75] : memref<32x128xbf16, #tpu.memory_space<vmem>>, vector<32x128xbf16>
    %cst_76 = arith.constant dense<0.000000e+00> : vector<8x128xf32>
    %123 = tpu.matmul %121, %122, %cst_76 {dimension_numbers = #tpu.dot_dimension_numbers<[1], [0], [0], [1], [0, 0, 1, 1], [], []>} : vector<8x32xbf16>, vector<32x128xbf16>, vector<8x128xf32> -> vector<8x128xf32>
    %c0_77 = arith.constant 0 : index
    %c0_78 = arith.constant 0 : index
    %124 = vector.load %arg9[%c0_77, %c0_78] : memref<1x128xf32, #tpu.memory_space<vmem>>, vector<1x128xf32>
    %125 = vector.broadcast %124 : vector<1x128xf32> to vector<8x128xf32>
    %126 = arith.addf %123, %125 : vector<8x128xf32>
    %c0_79 = arith.constant 0 : index
    %c0_80 = arith.constant 0 : index
    %127 = vector.load %arg10[%c0_79, %c0_80] : memref<8x128xf32, #tpu.memory_space<vmem>>, vector<8x128xf32>
    tpu.vector_store %arg10[%c0_79, %c0_80], %126 {strides = array<i32>} : memref<8x128xf32, #tpu.memory_space<vmem>>, vector<8x128xf32>,
    return
  }
}

</mosaic_0001>

<llo_original>
// kernel: decoder_step.1
$region0: #{decoder_step.1}
  #allocation0 [shape = 'u32[]', space=smem, size = 0x4, offset = 0x4, fixed_abs, tag = 'smem constant byte address 0x4 - core index']
  #allocation1 [shape = 'u32[72,128]{1,0:T(1,128)}', space=vmem, size = 0x9000, scoped, tag = 'internal scratch']
  #allocation2 [shape = 'f32[8,64]{1,0:T(8,128)}', space=vmem, size = 0x1000, scoped, tag = 'scratch operand']
  %s0 = inlined_call_operand.vmem [shape: s32[8], index: 0, kind: input, shape index: {}]
  %s1 = inlined_call_operand.vmem [shape: f32[50,16], index: 1, kind: input, shape index: {}]
  %s2 = inlined_call_operand.hbm [shape: f32[2,8,32], index: 2, kind: input, shape index: {}, may-alias: {2,11}]
  %s3 = inlined_call_operand.hbm [shape: f32[2,8,32], index: 3, kind: input, shape index: {}, may-alias: {3,12}]
  %s4 = inlined_call_operand.vmem [shape: bf16[64,128], index: 4, kind: input, shape index: {}]
  %s5 = inlined_call_operand.vmem [shape: f32[1,128], index: 5, kind: input, shape index: {}]
  %s6 = inlined_call_operand.vmem [shape: bf16[64,128], index: 6, kind: input, shape index: {}]
  %s7 = inlined_call_operand.vmem [shape: f32[1,128], index: 7, kind: input, shape index: {}]
  %s8 = inlined_call_operand.hbm [shape: bf16[32,128], index: 8, kind: input, shape index: {}]
  %s9 = inlined_call_operand.vmem [shape: f32[1,128], index: 9, kind: input, shape index: {}]
  %s10 = inlined_call_operand.hbm [shape: f32[8,128], index: 10, kind: output, shape index: {0}]
  %s11 = inlined_call_operand.hbm [shape: f32[2,8,32], index: 11, kind: output, shape index: {1}, may-alias: {2,11}]
  %s12 = inlined_call_operand.hbm [shape: f32[2,8,32], index: 12, kind: output, shape index: {2}, may-alias: {3,12}]
  %13 = xla_tuple %s10, %s11, %s12
  %s14 = sld [smem:[#allocation0]]
  $region82: #{decoder_step.1} parent=0
    _
  %s16 = ssub.s32 1, %s14
  %s17 = scalar_select 0, %s16, %s14
  $region1: #{decoder_step.1} parent=0
    #allocation3 [shape = 'u8[512]{0}', space=smem, size = 0x200, scoped, tag = 'input window, operand 0, single buffered']
    #allocation4 [shape = 's32[1]{0}', space=sflag, size = 0x4, scoped, tag = 'scoped memory for decoder_step.1']
    #allocation5 [shape = 's32[1]{0}', space=sflag, size = 0x4, scoped, tag = 'scoped memory for decoder_step.1']
    #allocation6 [shape = 's32[1]{0}', space=sflag, size = 0x4, scoped, tag = 'scoped memory for decoder_step.1']
    #allocation7 [shape = 'u8[8192]{0}', space=vmem, size = 0x2000, scoped, tag = 'input window, operand 2, single buffered']
    #allocation8 [shape = 'u8[8192]{0}', space=vmem, size = 0x2000, scoped, tag = 'input window, operand 3, single buffered']
    #allocation9 [shape = 's32[1]{0}', space=sflag, size = 0x4, scoped, tag = 'scoped memory for decoder_step.1']
    #allocation10 [shape = 'u8[8192]{0}', space=vmem, size = 0x2000, scoped, tag = 'input window, operand 8, single buffered']
    #allocation11 [shape = 'u8[4096]{0}', space=vmem, size = 0x1000, scoped, tag = 'output window, operand 0, single buffered']
    #allocation12 [shape = 'u8[8192]{0}', space=vmem, size = 0x2000, scoped, tag = 'output window, operand 1, single buffered']
    #allocation13 [shape = 's32[1]{0}', space=sflag, size = 0x4, scoped, tag = 'scoped memory for decoder_step.1']
    #allocation14 [shape = 'u8[8192]{0}', space=vmem, size = 0x2000, scoped, tag = 'output window, operand 2, single buffered']
    %18 = vsyncpa [#allocation6], 0
    %19 = vsyncpa [#allocation4], 0
    %20 = vsyncpa [#allocation9], 0
    %21 = vsyncpa [#allocation5], 0
    %22 = vsyncpa [#allocation13], 0
    // Predicated region
    $region2: #{decoder_step.1} parent=1 // pred_check
      _
    $region3: #{decoder_step.1} parent=1 // pred_check_branch
      %24 = sbr.rel (0) target = $region5
    $region4: #{decoder_step.1} parent=1 // pred_region
      %26 = vsyncadd [#allocation6], 0
      %s28 = sshll.u32 %s0, 4
      %s29 = int_to_ptr.vmem [resolvable:$true] %s28
      %31 = dma.vmem_to_smem %s29, 16, [#allocation3], [#allocation6]
    $region5: #{decoder_step.1} parent=1 // pred_fallthru
      _
    // Predicated region
    $region6: #{decoder_step.1} parent=1 // pred_check
      _
    $region7: #{decoder_step.1} parent=1 // pred_check_branch
      %33 = sbr.rel (0) target = $region9
    $region8: #{decoder_step.1} parent=1 // pred_region
      _
    $region9: #{decoder_step.1} parent=1 // pred_fallthru
      _
    // Predicated region
    $region10: #{decoder_step.1} parent=1 // pred_check
      _
    $region11: #{decoder_step.1} parent=1 // pred_check_branch
      %35 = sbr.rel (0) target = $region13
    $region12: #{decoder_step.1} parent=1 // pred_region
      %37 = vsyncadd [#allocation4], 0
      %s38 = sshll.u32 %s2, 4
      %s39 = int_to_ptr.hbm [resolvable:$true] %s38
      %s40 = sshll.u32 [#allocation7], 4
      %s41 = int_to_ptr.vmem [resolvable:$true] %s40
      %46 = dma.hbm_to_vmem [thread:$0]  %s39, 256, %s41, [#allocation4], 128, 128, 8
    $region13: #{decoder_step.1} parent=1 // pred_fallthru
      _
    // Predicated region
    $region14: #{decoder_step.1} parent=1 // pred_check
      _
    $region15: #{decoder_step.1} parent=1 // pred_check_branch
      %48 = sbr.rel (0) target = $region17
    $region16: #{decoder_step.1} parent=1 // pred_region
      %50 = vsyncadd [#allocation9], 0
      %s51 = sshll.u32 %s3, 4
      %s52 = int_to_ptr.hbm [resolvable:$true] %s51
      %s53 = sshll.u32 [#allocation8], 4
      %s54 = int_to_ptr.vmem [resolvable:$true] %s53
      %59 = dma.hbm_to_vmem [thread:$0]  %s52, 256, %s54, [#allocation9], 128, 128, 8
    $region17: #{decoder_step.1} parent=1 // pred_fallthru
      _
    // Predicated region
    $region18: #{decoder_step.1} parent=1 // pred_check
      _
    $region19: #{decoder_step.1} parent=1 // pred_check_branch
      %61 = sbr.rel (0) target = $region21
    $region20: #{decoder_step.1} parent=1 // pred_region
      _
    $region21: #{decoder_step.1} parent=1 // pred_fallthru
      _
    // Predicated region
    $region22: #{decoder_step.1} parent=1 // pred_check
      _
    $region23: #{decoder_step.1} parent=1 // pred_check_branch
      %63 = sbr.rel (0) target = $region25
    $region24: #{decoder_step.1} parent=1 // pred_region
      _
    $region25: #{decoder_step.1} parent=1 // pred_fallthru
      _
    // Predicated region
    $region26: #{decoder_step.1} parent=1 // pred_check
      _
    $region27: #{decoder_step.1} parent=1 // pred_check_branch
      %65 = sbr.rel (0) target = $region29
    $region28: #{decoder_step.1} parent=1 // pred_region
      _
    $region29: #{decoder_step.1} parent=1 // pred_fallthru
      _
    // Predicated region
    $region30: #{decoder_step.1} parent=1 // pred_check
      _
    $region31: #{decoder_step.1} parent=1 // pred_check_branch
      %67 = sbr.rel (0) target = $region33
    $region32: #{decoder_step.1} parent=1 // pred_region
      _
    $region33: #{decoder_step.1} parent=1 // pred_fallthru
      _
    // Predicated region
    $region34: #{decoder_step.1} parent=1 // pred_check
      _
    $region35: #{decoder_step.1} parent=1 // pred_check_branch
      %69 = sbr.rel (0) target = $region37
    $region36: #{decoder_step.1} parent=1 // pred_region
      %71 = vsyncadd [#allocation9], 0
      %s72 = sshll.u32 %s8, 4
      %s73 = int_to_ptr.hbm [resolvable:$true] %s72
      %s74 = sshll.u32 [#allocation10], 4
      %s75 = int_to_ptr.vmem [resolvable:$true] %s74
      %80 = dma.hbm_to_vmem [thread:$0]  %s73, 256, %s75, [#allocation9], 64, 64, 4
    $region37: #{decoder_step.1} parent=1 // pred_fallthru
      _
    // Predicated region
    $region38: #{decoder_step.1} parent=1 // pred_check
      _
    $region39: #{decoder_step.1} parent=1 // pred_check_branch
      %82 = sbr.rel (0) target = $region41
    $region40: #{decoder_step.1} parent=1 // pred_region
      _
    $region41: #{decoder_step.1} parent=1 // pred_fallthru
      _
    // Predicated region
    $region42: #{decoder_step.1} parent=1 // pred_check
      _
    $region43: #{decoder_step.1} parent=1 // pred_check_branch
      %84 = sbr.rel (0) target = $region45
    $region44: #{decoder_step.1} parent=1 // pred_region
      %86 = dma.done [#allocation6], 16
    $region45: #{decoder_step.1} parent=1 // pred_fallthru
      _
    // Predicated region
    $region46: #{decoder_step.1} parent=1 // pred_check
      _
    $region47: #{decoder_step.1} parent=1 // pred_check_branch
      %88 = sbr.rel (0) target = $region49
    $region48: #{decoder_step.1} parent=1 // pred_region
      %90 = dma.done [#allocation4], 256
    $region49: #{decoder_step.1} parent=1 // pred_fallthru
      _
    // Predicated region
    $region50: #{decoder_step.1} parent=1 // pred_check
      _
    $region51: #{decoder_step.1} parent=1 // pred_check_branch
      %92 = sbr.rel (0) target = $region53
    $region52: #{decoder_step.1} parent=1 // pred_region
      %94 = dma.done [#allocation9], 256
    $region53: #{decoder_step.1} parent=1 // pred_fallthru
      _
    // Predicated region
    $region54: #{decoder_step.1} parent=1 // pred_check
      _
    $region55: #{decoder_step.1} parent=1 // pred_check_branch
      %96 = sbr.rel (0) target = $region57
    $region56: #{decoder_step.1} parent=1 // pred_region
      %98 = dma.done [#allocation9], 256
    $region57: #{decoder_step.1} parent=1 // pred_fallthru
      _
    %99 = sfence
    %vm101 = vcmask 523264
    %102 = vst.msk [vmem:[#allocation2] sm:$0xff] %vm101, 0.0
    %s103 = sld [smem:[#allocation3]]
    %s104 = scalar_lea.vmem %s1, %s103
    %v105 = vld [vmem:[%s104] sm:$0x1]
    %vm106 = vcmask 122880
    %107 = vst.msk [vmem:[#allocation2] sm:$0x1] %vm106, %v105
    %s108 = sld [smem:[#allocation3 + $0x1]]
    %s109 = scalar_lea.vmem %s1, %s108
    %v110 = vld [vmem:[%s109] sm:$0x1]
    %111 = vst.msk [vmem:[#allocation2 + $0x1] sm:$0x1] %vm106, %v110
    %s112 = sld [smem:[#allocation3 + $0x2]]
    %s113 = scalar_lea.vmem %s1, %s112
    %v114 = vld [vmem:[%s113] sm:$0x1]
    %115 = vst.msk [vmem:[#allocation2 + $0x2] sm:$0x1] %vm106, %v114
    %s116 = sld [smem:[#allocation3 + $0x3]]
    %s117 = scalar_lea.vmem %s1, %s116
    %v118 = vld [vmem:[%s117] sm:$0x1]
    %119 = vst.msk [vmem:[#allocation2 + $0x3] sm:$0x1] %vm106, %v118
    %s120 = sld [smem:[#allocation3 + $0x4]]
    %s121 = scalar_lea.vmem %s1, %s120
    %v122 = vld [vmem:[%s121] sm:$0x1]
    %123 = vst.msk [vmem:[#allocation2 + $0x4] sm:$0x1] %vm106, %v122
    %s124 = sld [smem:[#allocation3 + $0x5]]
    %s125 = scalar_lea.vmem %s1, %s124
    %v126 = vld [vmem:[%s125] sm:$0x1]
    %127 = vst.msk [vmem:[#allocation2 + $0x5] sm:$0x1] %vm106, %v126
    %s128 = sld [smem:[#allocation3 + $0x6]]
    %s129 = scalar_lea.vmem %s1, %s128
    %v130 = vld [vmem:[%s129] sm:$0x1]
    %131 = vst.msk [vmem:[#allocation2 + $0x6] sm:$0x1] %vm106, %v130
    %s132 = sld [smem:[#allocation3 + $0x7]]
    %s133 = scalar_lea.vmem %s1, %s132
    %v134 = vld [vmem:[%s133] sm:$0x1]
    %135 = vst.msk [vmem:[#allocation2 + $0x7] sm:$0x1] %vm106, %v134
    %v136 = vld [vmem:[#allocation7] sm:$0xff]
    %v137 = vld [vmem:[#allocation8] sm:$0xff]
    %139 = vrot.lane.b32.xlu0 %v136, 16
    %v140 = vpop.permute.xlu0 %139
    %vm142 = vcmask 392320
    %143 = vst.msk [vmem:[#allocation2] sm:$0xff] %vm142, %v140
    %v144 = vld [vmem:[#allocation2] sm:$0xff]
    %v145 = vpack.c.bf16 %v144, %v144
    %v146 = vld [vmem:[%s4] sm:$0xf]
    %v147 = vld [vmem:[%s4 + $0x4] sm:$0xf]
    %v148 = vld [vmem:[%s4 + $0x8] sm:$0xf]
    %v149 = vld [vmem:[%s4 + $0xc] sm:$0xf]
    %v150 = vld [vmem:[%s4 + $0x10] sm:$0xf]
    %v151 = vld [vmem:[%s4 + $0x14] sm:$0xf]
    %v152 = vld [vmem:[%s4 + $0x18] sm:$0xf]
    %v153 = vld [vmem:[%s4 + $0x1c] sm:$0xf]
    %v154 = vld [vmem:[%s5] sm:$0x1]
    %v156 = vperm.slane %v154, 0
    %v166 = vunpack.c.l.b16 %v146
    %v167 = vunpack.c.l.b16 %v147
    %v168 = vunpack.c.l.b16 %v148
    %v169 = vunpack.c.l.b16 %v149
    %v170 = vunpack.c.l.b16 %v150
    %v171 = vunpack.c.l.b16 %v151
    %v172 = vunpack.c.l.b16 %v152
    %v173 = vunpack.c.l.b16 %v153
    %v174 = vpack.c.b16 %v167, %v166
    %v175 = vpack.c.b16 %v169, %v168
    %v176 = vpack.c.b16 %v171, %v170
    %v177 = vpack.c.b16 %v173, %v172
    %v183 = vsel %vm101, %v145, 0
    %185 = vmatpush.bf16.msra.mxu0 0
    %186 = vmatpush.bf16.msra.mxu0 0
    %187 = vmatpush.bf16.msra.mxu0 0
    %188 = vmatpush.bf16.msra.mxu0 0
    %189 = vmatpush.bf16.msra.mxu0 %v177
    %190 = vmatpush.bf16.msra.mxu0 %v176
    %191 = vmatpush.bf16.msra.mxu0 %v175
    %192 = vmatpush.bf16.msra.mxu0 %v174
    %193 = vmatmul.bf16.gmra.mxu0 %v183
    %v194 = vpop.f32.mrf.mxu0
    %v195 = vadd.f32 %v156, %v194
    %v196 = vpop.f32.mrf.mxu0
    %197 = vdwg.mxu0
    %v198 = vxor.u32 %v195, 2147483648
    %v199 = vmul.f32 %v198, 1.442695
    %v200 = vpow.pop %v199
    %v201 = vadd.f32 %v200, 1.0
    %v202 = vrcp.pop %v201
    %v203 = vmul.f32 %v201, %v202
    %v204 = vsub.f32 1.0, %v203
    %v205 = vmul.f32 %v202, %v204
    %v206 = vadd.f32 %v202, %v205
    %vm207 = vweird.f32 %v201
    %vm208 = vweird.f32 %v202
    %vm209 = vmor %vm207, %vm208
    %v210 = vsel %vm209, %v202, %v206
    %v211 = vand.u32 2147483647, %v201
    %vm212 = vcmp.eq.f32.partialorder %v211, 8.507059e+37
    %v213 = vand.u32 %v201, 2147483648
    %v214 = vor.u32 1.1754944e-38, %v213
    %v215 = vsel %vm212, %v214, %v210
    %v216 = vmul.f32 1.0, %v215
    %v217 = vtanh.pop %v195
    %219 = vrot.lane.b32.xlu0 %v137, 32
    %v220 = vpop.permute.xlu0 %219
    %v222 = vmul.f32 %v216, %v220
    %224 = vrot.lane.b32.xlu0 %v217, 64
    %v225 = vpop.permute.xlu0 %224
    %v227 = vmul.f32 %v216, %v225
    %229 = vrot.lane.b32.xlu0 %v227, 32
    %v230 = vpop.permute.xlu0 %229
    %v232 = vadd.f32 %v222, %v230
    %v233 = vtanh.pop %v232
    %235 = vrot.lane.b32.xlu0 %v233, 64
    %v236 = vpop.permute.xlu0 %235
    %v238 = vmul.f32 %v216, %v236
    %240 = vrot.lane.b32.xlu0 %v238, 32
    %v241 = vpop.permute.xlu0 %240
    %vm243 = vcmask 261120
    %244 = vst.msk [vmem:[#allocation12] sm:$0xff] %vm243, %v241
    %246 = vrot.lane.b32.xlu0 %v232, 96
    %v247 = vpop.permute.xlu0 %246
    %249 = vst.msk [vmem:[#allocation14] sm:$0xff] %vm243, %v247
    %250 = vst.msk [vmem:[#allocation2] sm:$0xff] %vm243, %v241
    %s251 = scalar_lea.vmem [#allocation7], 8
    %v252 = vld [vmem:[%s251] sm:$0xff]
    %s253 = scalar_lea.vmem [#allocation8], 8
    %v254 = vld [vmem:[%s253] sm:$0xff]
    %256 = vrot.lane.b32.xlu0 %v252, 32
    %v257 = vpop.permute.xlu0 %256
    %vm259 = vcmask 523520
    %260 = vst.msk [vmem:[#allocation2] sm:$0xff] %vm259, %v257
    %v261 = vld [vmem:[#allocation2] sm:$0xff]
    %v262 = vpack.c.bf16 %v261, %v261
    %v263 = vld [vmem:[%s6] sm:$0xf]
    %v264 = vld [vmem:[%s6 + $0x4] sm:$0xf]
    %v265 = vld [vmem:[%s6 + $0x8] sm:$0xf]
    %v266 = vld [vmem:[%s6 + $0xc] sm:$0xf]
    %v267 = vld [vmem:[%s6 + $0x10] sm:$0xf]
    %v268 = vld [vmem:[%s6 + $0x14] sm:$0xf]
    %v269 = vld [vmem:[%s6 + $0x18] sm:$0xf]
    %v270 = vld [vmem:[%s6 + $0x1c] sm:$0xf]
    %v271 = vld [vmem:[%s7] sm:$0x1]
    %v273 = vperm.slane %v271, 0
    %v283 = vunpack.c.l.b16 %v263
    %v284 = vunpack.c.l.b16 %v264
    %v285 = vunpack.c.l.b16 %v265
    %v286 = vunpack.c.l.b16 %v266
    %v287 = vunpack.c.l.b16 %v267
    %v288 = vunpack.c.l.b16 %v268
    %v289 = vunpack.c.l.b16 %v269
    %v290 = vunpack.c.l.b16 %v270
    %v291 = vpack.c.b16 %v284, %v283
    %v292 = vpack.c.b16 %v286, %v285
    %v293 = vpack.c.b16 %v288, %v287
    %v294 = vpack.c.b16 %v290, %v289
    %v300 = vsel %vm101, %v262, 0
    %302 = vmatpush.bf16.msra.mxu0 0
    %303 = vmatpush.bf16.msra.mxu0 0
    %304 = vmatpush.bf16.msra.mxu0 0
    %305 = vmatpush.bf16.msra.mxu0 0
    %306 = vmatpush.bf16.msra.mxu0 %v294
    %307 = vmatpush.bf16.msra.mxu0 %v293
    %308 = vmatpush.bf16.msra.mxu0 %v292
    %309 = vmatpush.bf16.msra.mxu0 %v291
    %310 = vmatmul.bf16.gmra.mxu0 %v300
    %v311 = vpop.f32.mrf.mxu0
    %v312 = vadd.f32 %v273, %v311
    %v313 = vpop.f32.mrf.mxu0
    %314 = vdwg.mxu0
    %v315 = vxor.u32 %v312, 2147483648
    %v316 = vmul.f32 %v315, 1.442695
    %v317 = vpow.pop %v316
    %v318 = vadd.f32 %v317, 1.0
    %v319 = vrcp.pop %v318
    %v320 = vmul.f32 %v318, %v319
    %v321 = vsub.f32 1.0, %v320
    %v322 = vmul.f32 %v319, %v321
    %v323 = vadd.f32 %v319, %v322
    %vm324 = vweird.f32 %v318
    %vm325 = vweird.f32 %v319
    %vm326 = vmor %vm324, %vm325
    %v327 = vsel %vm326, %v319, %v323
    %v328 = vand.u32 2147483647, %v318
    %vm329 = vcmp.eq.f32.partialorder %v328, 8.507059e+37
    %v330 = vand.u32 %v318, 2147483648
    %v331 = vor.u32 1.1754944e-38, %v330
    %v332 = vsel %vm329, %v331, %v327
    %v333 = vmul.f32 1.0, %v332
    %v334 = vtanh.pop %v312
    %336 = vrot.lane.b32.xlu0 %v254, 32
    %v337 = vpop.permute.xlu0 %336
    %v339 = vmul.f32 %v333, %v337
    %341 = vrot.lane.b32.xlu0 %v334, 64
    %v342 = vpop.permute.xlu0 %341
    %v344 = vmul.f32 %v333, %v342
    %346 = vrot.lane.b32.xlu0 %v344, 32
    %v347 = vpop.permute.xlu0 %346
    %v349 = vadd.f32 %v339, %v347
    %v350 = vtanh.pop %v349
    %352 = vrot.lane.b32.xlu0 %v350, 64
    %v353 = vpop.permute.xlu0 %352
    %v355 = vmul.f32 %v333, %v353
    %357 = vrot.lane.b32.xlu0 %v355, 32
    %v358 = vpop.permute.xlu0 %357
    %s360 = scalar_lea.vmem [#allocation12], 8
    %361 = vst.msk [vmem:[%s360] sm:$0xff] %vm243, %v358
    %363 = vrot.lane.b32.xlu0 %v349, 96
    %v364 = vpop.permute.xlu0 %363
    %s366 = scalar_lea.vmem [#allocation14], 8
    %367 = vst.msk [vmem:[%s366] sm:$0xff] %vm243, %v364
    %v368 = vpack.c.bf16 %v355, %v355
    %v369 = vld [vmem:[#allocation10] sm:$0xf]
    %v370 = vld [vmem:[#allocation10 + $0x4] sm:$0xf]
    %v371 = vld [vmem:[#allocation10 + $0x8] sm:$0xf]
    %v372 = vld [vmem:[#allocation10 + $0xc] sm:$0xf]
    %v373 = vld [vmem:[%s9] sm:$0x1]
    %v375 = vperm.slane %v373, 0
    %378 = vrot.lane.b32.xlu0 %v368, 32
    %v379 = vpop.permute.xlu0 %378
    %v384 = vunpack.c.l.b16 %v369
    %v385 = vunpack.c.l.b16 %v370
    %v386 = vunpack.c.l.b16 %v371
    %v387 = vunpack.c.l.b16 %v372
    %v388 = vpack.c.b16 %v385, %v384
    %v389 = vpack.c.b16 %v387, %v386
    %v393 = vsel %vm243, %v379, 0
    %395 = vmatpush.bf16.msra.mxu0 0
    %396 = vmatpush.bf16.msra.mxu0 0
    %397 = vmatpush.bf16.msra.mxu0 0
    %398 = vmatpush.bf16.msra.mxu0 0
    %399 = vmatpush.bf16.msra.mxu0 0
    %400 = vmatpush.bf16.msra.mxu0 0
    %401 = vmatpush.bf16.msra.mxu0 %v389
    %402 = vmatpush.bf16.msra.mxu0 %v388
    %403 = vmatmul.bf16.gmra.mxu0 %v393
    %v404 = vpop.f32.mrf.mxu0
    %v405 = vadd.f32 %v375, %v404
    %v406 = vpop.f32.mrf.mxu0
    %407 = vdwg.mxu0
    %408 = vst [vmem:[#allocation11] sm:$0xff] %v405
    // Predicated region
    $region58: #{decoder_step.1} parent=1 // pred_check
      _
    $region59: #{decoder_step.1} parent=1 // pred_check_branch
      %410 = sbr.rel (0) target = $region61
    $region60: #{decoder_step.1} parent=1 // pred_region
      %412 = vsyncadd [#allocation5], 0
      %s414 = sshll.u32 [#allocation11], 4
      %s415 = int_to_ptr.vmem [resolvable:$true] %s414
      %s416 = sshll.u32 %s10, 4
      %s417 = int_to_ptr.hbm [resolvable:$true] %s416
      %419 = dma.vmem_to_hbm [thread:$0]  %s415, 128, %s417, [#allocation5]
    $region61: #{decoder_step.1} parent=1 // pred_fallthru
      _
    // Predicated region
    $region62: #{decoder_step.1} parent=1 // pred_check
      _
    $region63: #{decoder_step.1} parent=1 // pred_check_branch
      %421 = sbr.rel (0) target = $region65
    $region64: #{decoder_step.1} parent=1 // pred_region
      %423 = vsyncadd [#allocation13], 0
      %s424 = sshll.u32 [#allocation12], 4
      %s425 = int_to_ptr.vmem [resolvable:$true] %s424
      %s426 = sshll.u32 %s11, 4
      %s427 = int_to_ptr.hbm [resolvable:$true] %s426
      %432 = dma.vmem_to_hbm [thread:$0]  %s425, 256, %s427, [#allocation13], 128, 128, 8
    $region65: #{decoder_step.1} parent=1 // pred_fallthru
      _
    // Predicated region
    $region66: #{decoder_step.1} parent=1 // pred_check
      _
    $region67: #{decoder_step.1} parent=1 // pred_check_branch
      %434 = sbr.rel (0) target = $region69
    $region68: #{decoder_step.1} parent=1 // pred_region
      %436 = vsyncadd [#allocation13], 0
      %s437 = sshll.u32 [#allocation14], 4
      %s438 = int_to_ptr.vmem [resolvable:$true] %s437
      %s439 = sshll.u32 %s12, 4
      %s440 = int_to_ptr.hbm [resolvable:$true] %s439
      %445 = dma.vmem_to_hbm [thread:$0]  %s438, 256, %s440, [#allocation13], 128, 128, 8
    $region69: #{decoder_step.1} parent=1 // pred_fallthru
      _
    // Predicated region
    $region70: #{decoder_step.1} parent=1 // pred_check
      _
    $region71: #{decoder_step.1} parent=1 // pred_check_branch
      %447 = sbr.rel (0) target = $region73
    $region72: #{decoder_step.1} parent=1 // pred_region
      %449 = dma.done [#allocation5], 128
    $region73: #{decoder_step.1} parent=1 // pred_fallthru
      _
    // Predicated region
    $region74: #{decoder_step.1} parent=1 // pred_check
      _
    $region75: #{decoder_step.1} parent=1 // pred_check_branch
      %451 = sbr.rel (0) target = $region77
    $region76: #{decoder_step.1} parent=1 // pred_region
      %453 = dma.done [#allocation13], 256
    $region77: #{decoder_step.1} parent=1 // pred_fallthru
      _
    // Predicated region
    $region78: #{decoder_step.1} parent=1 // pred_check
      _
    $region79: #{decoder_step.1} parent=1 // pred_check_branch
      %455 = sbr.rel (0) target = $region81
    $region80: #{decoder_step.1} parent=1 // pred_region
      %457 = dma.done [#allocation13], 256
    $region81: #{decoder_step.1} parent=1 // pred_fallthru
      _
    %458 = vsyncpa [#allocation4], 1
    %459 = vsyncpa [#allocation9], 1
    %460 = vsyncpa [#allocation5], 1
    %461 = vsyncpa [#allocation13], 1
    %462 = vsyncpa [#allocation6], 1

</llo_original>
